<compile_context>
chip_gen: v6e
topology: v6e:2x2x1
jax: 0.10.0
libtpu: 0.0.40
codegen_flags: <defaults>
</compile_context>

<pallas_src>
from functools import partial

import jax
import jax.numpy as jnp
from jax.experimental import pallas as pl
from jax.experimental.pallas import tpu as pltpu


def _round_up(x: int, m: int) -> int:
    return ((x + m - 1) // m) * m


def mlp_kernel(x_ref, w1_ref, b1_ref, w2_ref, b2_ref, o_ref):
    # Fused: out = relu(x @ W1 + b1) @ W2 + b2  (f32 accumulation on the MXU).
    h = jnp.dot(x_ref[...], w1_ref[...],
                preferred_element_type=jnp.float32)            # (TB, 256) f32
    # Bias + ReLU fused with the bf16 downcast (single live narrow h tensor).
    h = jnp.maximum(h + b1_ref[...], 0.0).astype(w2_ref.dtype)  # (TB, 256) bf16
    o = jnp.dot(h, w2_ref[...],
                preferred_element_type=jnp.float32)            # (TB, 128) f32
    o_ref[...] = (o + b2_ref[...]).astype(o_ref.dtype)          # lane-dense store


def prepare_params(w1, b1, w2, b2, compute_dtype=jnp.bfloat16):
    """One-time packing of the weights for the kernel.

    w1: (ob, hid), b1: (1, hid) or (hid,), w2: (hid, ac), b2: (1, ac) or (ac,).
    Returns (w1_c, b1_c, w2_p, b2_p, ac) with w2/b2 zero-padded to a lane-dense
    128-multiple output width. Call once; reuse across forward calls.
    """
    ob, hid = w1.shape
    hid2, ac = w2.shape
    assert hid == hid2
    ac_pad = _round_up(ac, 128)

    w1_c = w1.astype(compute_dtype)                                   # (ob, hid)
    b1_c = jnp.asarray(b1, jnp.float32).reshape(1, hid)               # (1, hid)
    w2_p = jnp.zeros((hid, ac_pad), compute_dtype).at[:, :ac].set(
        w2.astype(compute_dtype))                                     # (hid, 128)
    b2_p = jnp.zeros((1, ac_pad), jnp.float32).at[:, :ac].set(
        jnp.asarray(b2, jnp.float32).reshape(1, ac))                  # (1, 128)
    return (w1_c, b1_c, w2_p, b2_p, ac)


def _select_tb(B: int) -> int:
    """Batch tile: big enough to hide per-step overhead, >=2 grid steps when
    possible (v7x megacore), MXU-friendly multiples when large."""
    b8 = _round_up(max(B, 1), 8)
    if b8 <= 8:
        return 8
    half = _round_up(-(-b8 // 2), 8)      # ceil(b8/2) rounded to 8
    tb = min(512, half)
    if tb >= 256:
        tb = (tb // 256) * 256
    elif tb >= 128:
        tb = (tb // 128) * 128
    return max(8, tb)


@partial(jax.jit, static_argnames=("tb", "ac", "out_dtype"))
def _forward_jit(x, w1_c, b1_c, w2_p, b2_p, *, tb, ac, out_dtype):
    B, ob = x.shape
    hid = w1_c.shape[1]
    ac_pad = w2_p.shape[1]
    compute_dtype = w1_c.dtype

    b_pad = _round_up(B, tb)
    grid = (b_pad // tb,)

    x_c = x.astype(compute_dtype)
    if b_pad != B:
        x_c = jnp.pad(x_c, ((0, b_pad - B), (0, 0)))

    out_padded = pl.pallas_call(
        mlp_kernel,
        out_shape=jax.ShapeDtypeStruct((b_pad, ac_pad), out_dtype),
        grid=grid,
        in_specs=[
            pl.BlockSpec((tb, ob), lambda i: (i, 0)),       # x: tiled over batch
            pl.BlockSpec((ob, hid), lambda i: (0, 0)),      # w1: resident
            pl.BlockSpec((1, hid), lambda i: (0, 0)),       # b1: resident
            pl.BlockSpec((hid, ac_pad), lambda i: (0, 0)),  # w2: resident
            pl.BlockSpec((1, ac_pad), lambda i: (0, 0)),    # b2: resident
        ],
        out_specs=pl.BlockSpec((tb, ac_pad), lambda i: (i, 0)),
        compiler_params=pltpu.CompilerParams(
            dimension_semantics=("parallel",),
        ),
    )(x_c, w1_c, b1_c, w2_p, b2_p)

    # Slice fuses under jit (no separate full-slab HBM round trip).
    return out_padded[:B, :ac].astype(jnp.float32)


def net_forward(x, params, out_dtype=jnp.float32):
    """x: (B, ob). params: output of prepare_params()."""
    w1_c, b1_c, w2_p, b2_p, ac = params
    tb = _select_tb(x.shape[0])
    return _forward_jit(x, w1_c, b1_c, w2_p, b2_p,
                        tb=tb, ac=ac, out_dtype=out_dtype)


def init_linear_params(key, in_features, out_features):
    # Mirror PyTorch nn.Linear default init: U(-1/sqrt(in), 1/sqrt(in))
    kw, kb = jax.random.split(key)
    bound = 1.0 / jnp.sqrt(jnp.float32(in_features))
    w = jax.random.uniform(kw, (in_features, out_features),
                           dtype=jnp.float32, minval=-bound, maxval=bound)
    b = jax.random.uniform(kb, (1, out_features),
                           dtype=jnp.float32, minval=-bound, maxval=bound)
    return w, b


if __name__ == "__main__":
    # Small, DQN-like sizes: observation dim 8, 4 actions, batch 2.
    ob_size, ac_size, batch = 8, 4, 2
    hidden = 256

    key = jax.random.PRNGKey(0)
    k_x, k_fc1, k_fc2 = jax.random.split(key, 3)

    x = jax.random.normal(k_x, (batch, ob_size), dtype=jnp.float32)
    w1, b1 = init_linear_params(k_fc1, ob_size, hidden)
    w2, b2 = init_linear_params(k_fc2, hidden, ac_size)

    params = prepare_params(w1, b1, w2, b2)        # one-time weight packing
    out = net_forward(x, params)
    out = jax.block_until_ready(out)
    assert out.shape == (batch, ac_size)

    # Reference matching the kernel's compute path (bf16 operands, f32 accum).
    xb = x.astype(jnp.bfloat16).astype(jnp.float32)
    w1b = w1.astype(jnp.bfloat16).astype(jnp.float32)
    w2b = w2.astype(jnp.bfloat16).astype(jnp.float32)
    h = jnp.maximum(xb @ w1b + b1, 0.0)
    ref_bf16 = h.astype(jnp.bfloat16).astype(jnp.float32) @ w2b + b2
    assert jnp.allclose(out, ref_bf16, atol=2e-3, rtol=2e-3)

    # Sanity check against the exact f32 PyTorch-equivalent forward.
    ref_f32 = jnp.maximum(x @ w1 + b1, 0.0) @ w2 + b2
    assert jnp.allclose(out, ref_f32, atol=5e-2, rtol=5e-2)

    print("KERNEL_OK")
</pallas_src>

<mosaic_0001>
module attributes {stable_mosaic.version = 11 : i64} {
  func.func @mlp_kernel(%arg0: i32, %arg1: memref<8x8xbf16, #tpu.memory_space<vmem>>, %arg2: memref<8x256xbf16, #tpu.memory_space<vmem>>, %arg3: memref<1x256xf32, #tpu.memory_space<vmem>>, %arg4: memref<256x128xbf16, #tpu.memory_space<vmem>>, %arg5: memref<1x128xf32, #tpu.memory_space<vmem>>, %arg6: memref<8x128xf32, #tpu.memory_space<vmem>>) attributes {dimension_semantics = [#tpu.dimension_semantics<parallel>], iteration_bounds = array<i64: 1>, scalar_prefetch = 0 : i64, scratch_operands = 0 : i64, tpu.core_type = #tpu.core_type<tc>, window_params = [{transform_indices = @transform_0, window_bounds = array<i64: 8, 8>}, {pipeline_mode = #tpu.pipeline_mode<synchronous>, transform_indices = @transform_1, window_bounds = array<i64: 8, 256>}, {pipeline_mode = #tpu.pipeline_mode<synchronous>, transform_indices = @transform_2, window_bounds = array<i64: 1, 256>}, {pipeline_mode = #tpu.pipeline_mode<synchronous>, transform_indices = @transform_3, window_bounds = array<i64: 256, 128>}, {pipeline_mode = #tpu.pipeline_mode<synchronous>, transform_indices = @transform_4, window_bounds = array<i64: 1, 128>}, {transform_indices = @transform_5, window_bounds = array<i64: 8, 128>}]} {
    %c0 = arith.constant 0 : index
    %c0_0 = arith.constant 0 : index
    %0 = vector.load %arg1[%c0, %c0_0] : memref<8x8xbf16, #tpu.memory_space<vmem>>, vector<8x8xbf16>
    %c0_1 = arith.constant 0 : index
    %c0_2 = arith.constant 0 : index
    %1 = vector.load %arg2[%c0_1, %c0_2] : memref<8x256xbf16, #tpu.memory_space<vmem>>, vector<8x256xbf16>
    %cst = arith.constant dense<0.000000e+00> : vector<8x256xf32>
    %2 = tpu.matmul %0, %1, %cst {dimension_numbers = #tpu.dot_dimension_numbers<[1], [0], [0], [1], [0, 0, 1, 1], [], []>} : vector<8x8xbf16>, vector<8x256xbf16>, vector<8x256xf32> -> vector<8x256xf32>
    %c0_3 = arith.constant 0 : index
    %c0_4 = arith.constant 0 : index
    %3 = vector.load %arg3[%c0_3, %c0_4] : memref<1x256xf32, #tpu.memory_space<vmem>>, vector<1x256xf32>
    %4 = vector.broadcast %3 : vector<1x256xf32> to vector<8x256xf32>
    %5 = arith.addf %2, %4 : vector<8x256xf32>
    %cst_5 = arith.constant 0.000000e+00 : f32
    %6 = vector.broadcast %cst_5 : f32 to vector<8x256xf32>
    %7 = arith.maximumf %5, %6 : vector<8x256xf32>
    %8 = arith.truncf %7 : vector<8x256xf32> to vector<8x256xbf16>
    %c0_6 = arith.constant 0 : index
    %c0_7 = arith.constant 0 : index
    %9 = vector.load %arg4[%c0_6, %c0_7] : memref<256x128xbf16, #tpu.memory_space<vmem>>, vector<256x128xbf16>
    %cst_8 = arith.constant dense<0.000000e+00> : vector<8x128xf32>
    %10 = tpu.matmul %8, %9, %cst_8 {dimension_numbers = #tpu.dot_dimension_numbers<[1], [0], [0], [1], [0, 0, 1, 1], [], []>} : vector<8x256xbf16>, vector<256x128xbf16>, vector<8x128xf32> -> vector<8x128xf32>
    %c0_9 = arith.constant 0 : index
    %c0_10 = arith.constant 0 : index
    %11 = vector.load %arg5[%c0_9, %c0_10] : memref<1x128xf32, #tpu.memory_space<vmem>>, vector<1x128xf32>
    %12 = vector.broadcast %11 : vector<1x128xf32> to vector<8x128xf32>
    %13 = arith.addf %10, %12 : vector<8x128xf32>
    %c0_11 = arith.constant 0 : index
    %c0_12 = arith.constant 0 : index
    %14 = vector.load %arg6[%c0_11, %c0_12] : memref<8x128xf32, #tpu.memory_space<vmem>>, vector<8x128xf32>
    tpu.vector_store %arg6[%c0_11, %c0_12], %13 {strides = array<i32>} : memref<8x128xf32, #tpu.memory_space<vmem>>, vector<8x128xf32>,
    return
  }
  func.func @transform_0(%arg0: i32) -> (i32, i32) {
    %c0_i32 = arith.constant 0 : i32
    %c0_i32_0 = arith.constant 0 : i32
    return %arg0, %c0_i32 : i32, i32
  }
  func.func @transform_1(%arg0: i32) -> (i32, i32) {
    %c0_i32 = arith.constant 0 : i32
    %c0_i32_0 = arith.constant 0 : i32
    %c0_i32_1 = arith.constant 0 : i32
    return %c0_i32, %c0_i32_0 : i32, i32
  }
  func.func @transform_2(%arg0: i32) -> (i32, i32) {
    %c0_i32 = arith.constant 0 : i32
    %c0_i32_0 = arith.constant 0 : i32
    %c0_i32_1 = arith.constant 0 : i32
    return %c0_i32, %c0_i32_0 : i32, i32
  }
  func.func @transform_3(%arg0: i32) -> (i32, i32) {
    %c0_i32 = arith.constant 0 : i32
    %c0_i32_0 = arith.constant 0 : i32
    %c0_i32_1 = arith.constant 0 : i32
    return %c0_i32, %c0_i32_0 : i32, i32
  }
  func.func @transform_4(%arg0: i32) -> (i32, i32) {
    %c0_i32 = arith.constant 0 : i32
    %c0_i32_0 = arith.constant 0 : i32
    %c0_i32_1 = arith.constant 0 : i32
    return %c0_i32, %c0_i32_0 : i32, i32
  }
  func.func @transform_5(%arg0: i32) -> (i32, i32) {
    %c0_i32 = arith.constant 0 : i32
    %c0_i32_0 = arith.constant 0 : i32
    return %arg0, %c0_i32 : i32, i32
  }
}

</mosaic_0001>

<llo_original>
// kernel: _forward_jit.1
$region0: #{_forward_jit.1}
  #allocation0 [shape = 'u32[]', space=smem, size = 0x4, offset = 0x4, fixed_abs, tag = 'smem constant byte address 0x4 - core index']
  #allocation1 [shape = 'u32[144,128]{1,0:T(1,128)}', space=vmem, size = 0x12000, scoped, tag = 'internal scratch']
  %s0 = inlined_call_operand.vmem [shape: bf16[8,8], index: 0, kind: input, shape index: {}]
  %s1 = inlined_call_operand.vmem [shape: bf16[8,256], index: 1, kind: input, shape index: {}]
  %s2 = inlined_call_operand.vmem [shape: f32[1,256], index: 2, kind: input, shape index: {}]
  %s3 = inlined_call_operand.hbm [shape: bf16[256,128], index: 3, kind: input, shape index: {}]
  %s4 = inlined_call_operand.vmem [shape: f32[1,128], index: 4, kind: input, shape index: {}]
  %s5 = inlined_call_operand.vmem [shape: f32[8,128], index: 5, kind: output, shape index: {}]
  %s6 = sld [smem:[#allocation0]]
  $region34: #{_forward_jit.1} parent=0
    _
  %s8 = ssub.s32 1, %s6
  %s9 = scalar_select 0, %s8, %s6
  $region1: #{_forward_jit.1} parent=0
    #allocation2 [shape = 'u8[65536]{0}', space=vmem, size = 0x10000, scoped, tag = 'input window, operand 3, single buffered']
    #allocation3 [shape = 's32[1]{0}', space=sflag, size = 0x4, scoped, tag = 'scoped memory for _forward_jit.1']
    %10 = vsyncpa [#allocation3], 0
    // Predicated region
    $region2: #{_forward_jit.1} parent=1 // pred_check
      _
    $region3: #{_forward_jit.1} parent=1 // pred_check_branch
      %12 = sbr.rel (0) target = $region5
    $region4: #{_forward_jit.1} parent=1 // pred_region
      _
    $region5: #{_forward_jit.1} parent=1 // pred_fallthru
      _
    // Predicated region
    $region6: #{_forward_jit.1} parent=1 // pred_check
      _
    $region7: #{_forward_jit.1} parent=1 // pred_check_branch
      %14 = sbr.rel (0) target = $region9
    $region8: #{_forward_jit.1} parent=1 // pred_region
      _
    $region9: #{_forward_jit.1} parent=1 // pred_fallthru
      _
    // Predicated region
    $region10: #{_forward_jit.1} parent=1 // pred_check
      _
    $region11: #{_forward_jit.1} parent=1 // pred_check_branch
      %16 = sbr.rel (0) target = $region13
    $region12: #{_forward_jit.1} parent=1 // pred_region
      _
    $region13: #{_forward_jit.1} parent=1 // pred_fallthru
      _
    // Predicated region
    $region14: #{_forward_jit.1} parent=1 // pred_check
      _
    $region15: #{_forward_jit.1} parent=1 // pred_check_branch
      %18 = sbr.rel (0) target = $region17
    $region16: #{_forward_jit.1} parent=1 // pred_region
      %s20 = ssub.s32 2048, 2048
      %21 = vsyncadd [#allocation3], %s20
      %s22 = sshll.u32 [#allocation2], 4
      %s23 = int_to_ptr.vmem [resolvable:$true] %s22
      %28 = dma.hbm_to_vmem [thread:$0]  %s3, 2048, %s23, [#allocation3], 64, 64, 4
    $region17: #{_forward_jit.1} parent=1 // pred_fallthru
      _
    // Predicated region
    $region18: #{_forward_jit.1} parent=1 // pred_check
      _
    $region19: #{_forward_jit.1} parent=1 // pred_check_branch
      %30 = sbr.rel (0) target = $region21
    $region20: #{_forward_jit.1} parent=1 // pred_region
      _
    $region21: #{_forward_jit.1} parent=1 // pred_fallthru
      _
    // Predicated region
    $region22: #{_forward_jit.1} parent=1 // pred_check
      _
    $region23: #{_forward_jit.1} parent=1 // pred_check_branch
      %32 = sbr.rel (0) target = $region25
    $region24: #{_forward_jit.1} parent=1 // pred_region
      %33 = dma.done [#allocation3], 2048
    $region25: #{_forward_jit.1} parent=1 // pred_fallthru
      _
    %v35 = vld [vmem:[%s0] sm:$0xf]
    %v36 = vld [vmem:[%s1] sm:$0xff]
    %v37 = vld [vmem:[%s2] sm:$0x3]
    %v39 = vlaneseq
    %v40 = vshrl.u32 %v39, 7
    %v41 = vsub.s32 0, %v40
    %v42 = vrot.slane %v37, %v41
    %v43 = vlaneseq
    %v44 = vshrl.u32 %v43, 7
    %v45 = vsub.s32 1, %v44
    %v46 = vrot.slane %v37, %v45
    %v50 = vunpack.c.l.b16 %v36
    %v51 = vunpack.c.h.b16 %v36
    %v52 = vpack.c.b16 %v50, %v50
    %v53 = vpack.c.b16 %v51, %v51
    %vm54 = vcmask 64512
    %v56 = vsel %vm54, %v35, 0
    %vm58 = vcmask 1043456
    %v60 = vsel %vm58, %v52, 0
    %v63 = vsel %vm58, %v53, 0
    %65 = vmatprep.subr.bf16.mxu0 0
    %66 = vmatpush1.bf16.msra.mxu0 0
    %67 = vmatprep.subr.bf16.mxu0 0
    %68 = vmatpush1.bf16.msra.mxu0 0
    %69 = vmatprep.subr.bf16.mxu0 0
    %70 = vmatpush1.bf16.msra.mxu0 0
    %71 = vmatprep.subr.bf16.mxu0 0
    %72 = vmatpush1.bf16.msra.mxu0 0
    %73 = vmatprep.subr.bf16.mxu0 0
    %74 = vmatpush1.bf16.msra.mxu0 0
    %75 = vmatprep.subr.bf16.mxu0 0
    %76 = vmatpush1.bf16.msra.mxu0 0
    %77 = vmatprep.subr.bf16.mxu0 0
    %78 = vmatpush1.bf16.msra.mxu0 0
    %79 = vmatprep.subr.bf16.mxu0 %v63
    %80 = vmatpush1.bf16.msra.mxu0 %v60
    %81 = vmatprep.subr.bf16.mxu0 0
    %82 = vmatpush2.bf16.msra.mxu0 0
    %83 = vmatprep.subr.bf16.mxu0 0
    %84 = vmatpush2.bf16.msra.mxu0 0
    %85 = vmatprep.subr.bf16.mxu0 0
    %86 = vmatpush2.bf16.msra.mxu0 0
    %87 = vmatprep.subr.bf16.mxu0 0
    %88 = vmatpush2.bf16.msra.mxu0 0
    %89 = vmatprep.subr.bf16.mxu0 0
    %90 = vmatpush2.bf16.msra.mxu0 0
    %91 = vmatprep.subr.bf16.mxu0 0
    %92 = vmatpush2.bf16.msra.mxu0 0
    %93 = vmatprep.subr.bf16.mxu0 0
    %94 = vmatpush2.bf16.msra.mxu0 0
    %95 = vmatprep.subr.bf16.mxu0 0
    %96 = vmatpush2.bf16.msra.mxu0 0
    %97 = vmatprep.mubr.bf16.mxu0 0
    %98 = vmatmul.mubr.bf16.gmra.mxu0 %v56
    %v99 = vpop.f32.mrf.mxu0
    %v100 = vadd.f32 %v42, %v99
    %v101 = vpop.f32.mrf.mxu0
    %v102 = vadd.f32 %v46, %v101
    %v103 = vpop.f32.mrf.mxu0
    %v104 = vpop.f32.mrf.mxu0
    %105 = vdwg.mxu0
    %v106 = vmax.f32 %v100, 0.0
    %v107 = vmax.f32 %v102, 0.0
    %v108 = vpack.c.bf16 %v106, %v106
    %v109 = vpack.c.bf16 %v107, %v107
    %v110 = vld [vmem:[#allocation2] sm:$0xf]
    %v111 = vld [vmem:[#allocation2 + $0x4] sm:$0xf]
    %v112 = vld [vmem:[#allocation2 + $0x8] sm:$0xf]
    %v113 = vld [vmem:[#allocation2 + $0xc] sm:$0xf]
    %v114 = vld [vmem:[#allocation2 + $0x10] sm:$0xf]
    %v115 = vld [vmem:[#allocation2 + $0x14] sm:$0xf]
    %v116 = vld [vmem:[#allocation2 + $0x18] sm:$0xf]
    %v117 = vld [vmem:[#allocation2 + $0x1c] sm:$0xf]
    %v118 = vld [vmem:[#allocation2 + $0x20] sm:$0xf]
    %v119 = vld [vmem:[#allocation2 + $0x24] sm:$0xf]
    %v120 = vld [vmem:[#allocation2 + $0x28] sm:$0xf]
    %v121 = vld [vmem:[#allocation2 + $0x2c] sm:$0xf]
    %v122 = vld [vmem:[#allocation2 + $0x30] sm:$0xf]
    %v123 = vld [vmem:[#allocation2 + $0x34] sm:$0xf]
    %v124 = vld [vmem:[#allocation2 + $0x38] sm:$0xf]
    %v125 = vld [vmem:[#allocation2 + $0x3c] sm:$0xf]
    %v126 = vld [vmem:[#allocation2 + $0x40] sm:$0xf]
    %v127 = vld [vmem:[#allocation2 + $0x44] sm:$0xf]
    %v128 = vld [vmem:[#allocation2 + $0x48] sm:$0xf]
    %v129 = vld [vmem:[#allocation2 + $0x4c] sm:$0xf]
    %v130 = vld [vmem:[#allocation2 + $0x50] sm:$0xf]
    %v131 = vld [vmem:[#allocation2 + $0x54] sm:$0xf]
    %v132 = vld [vmem:[#allocation2 + $0x58] sm:$0xf]
    %v133 = vld [vmem:[#allocation2 + $0x5c] sm:$0xf]
    %v134 = vld [vmem:[#allocation2 + $0x60] sm:$0xf]
    %v135 = vld [vmem:[#allocation2 + $0x64] sm:$0xf]
    %v136 = vld [vmem:[#allocation2 + $0x68] sm:$0xf]
    %v137 = vld [vmem:[#allocation2 + $0x6c] sm:$0xf]
    %v138 = vld [vmem:[#allocation2 + $0x70] sm:$0xf]
    %v139 = vld [vmem:[#allocation2 + $0x74] sm:$0xf]
    %v140 = vld [vmem:[#allocation2 + $0x78] sm:$0xf]
    %v141 = vld [vmem:[#allocation2 + $0x7c] sm:$0xf]
    %v142 = vld [vmem:[%s4] sm:$0x1]
    %v144 = vlaneseq
    %v145 = vshrl.u32 %v144, 7
    %v146 = vsub.s32 0, %v145
    %v147 = vrot.slane %v142, %v146
    %v181 = vunpack.c.l.b16 %v110
    %v182 = vunpack.c.l.b16 %v111
    %v183 = vunpack.c.l.b16 %v112
    %v184 = vunpack.c.l.b16 %v113
    %v185 = vunpack.c.l.b16 %v114
    %v186 = vunpack.c.l.b16 %v115
    %v187 = vunpack.c.l.b16 %v116
    %v188 = vunpack.c.l.b16 %v117
    %v189 = vunpack.c.l.b16 %v118
    %v190 = vunpack.c.l.b16 %v119
    %v191 = vunpack.c.l.b16 %v120
    %v192 = vunpack.c.l.b16 %v121
    %v193 = vunpack.c.l.b16 %v122
    %v194 = vunpack.c.l.b16 %v123
    %v195 = vunpack.c.l.b16 %v124
    %v196 = vunpack.c.l.b16 %v125
    %v197 = vunpack.c.l.b16 %v126
    %v198 = vunpack.c.l.b16 %v127
    %v199 = vunpack.c.l.b16 %v128
    %v200 = vunpack.c.l.b16 %v129
    %v201 = vunpack.c.l.b16 %v130
    %v202 = vunpack.c.l.b16 %v131
    %v203 = vunpack.c.l.b16 %v132
    %v204 = vunpack.c.l.b16 %v133
    %v205 = vunpack.c.l.b16 %v134
    %v206 = vunpack.c.l.b16 %v135
    %v207 = vunpack.c.l.b16 %v136
    %v208 = vunpack.c.l.b16 %v137
    %v209 = vunpack.c.l.b16 %v138
    %v210 = vunpack.c.l.b16 %v139
    %v211 = vunpack.c.l.b16 %v140
    %v212 = vunpack.c.l.b16 %v141
    %v213 = vpack.c.b16 %v182, %v181
    %v214 = vpack.c.b16 %v184, %v183
    %v215 = vpack.c.b16 %v186, %v185
    %v216 = vpack.c.b16 %v188, %v187
    %v217 = vpack.c.b16 %v190, %v189
    %v218 = vpack.c.b16 %v192, %v191
    %v219 = vpack.c.b16 %v194, %v193
    %v220 = vpack.c.b16 %v196, %v195
    %v221 = vpack.c.b16 %v198, %v197
    %v222 = vpack.c.b16 %v200, %v199
    %v223 = vpack.c.b16 %v202, %v201
    %v224 = vpack.c.b16 %v204, %v203
    %v225 = vpack.c.b16 %v206, %v205
    %v226 = vpack.c.b16 %v208, %v207
    %v227 = vpack.c.b16 %v210, %v209
    %v228 = vpack.c.b16 %v212, %v211
    %245 = vmatprep.subr.bf16.mxu0 0
    %246 = vmatpush1.bf16.msra.mxu0 %v220
    %247 = vmatprep.subr.bf16.mxu0 0
    %248 = vmatpush1.bf16.msra.mxu0 %v219
    %249 = vmatprep.subr.bf16.mxu0 0
    %250 = vmatpush1.bf16.msra.mxu0 %v218
    %251 = vmatprep.subr.bf16.mxu0 0
    %252 = vmatpush1.bf16.msra.mxu0 %v217
    %253 = vmatprep.subr.bf16.mxu0 0
    %254 = vmatpush1.bf16.msra.mxu0 %v216
    %255 = vmatprep.subr.bf16.mxu0 0
    %256 = vmatpush1.bf16.msra.mxu0 %v215
    %257 = vmatprep.subr.bf16.mxu0 0
    %258 = vmatpush1.bf16.msra.mxu0 %v214
    %259 = vmatprep.subr.bf16.mxu0 0
    %260 = vmatpush1.bf16.msra.mxu0 %v213
    %261 = vmatprep.subr.bf16.mxu0 0
    %262 = vmatpush2.bf16.msra.mxu0 %v228
    %263 = vmatprep.subr.bf16.mxu0 0
    %264 = vmatpush2.bf16.msra.mxu0 %v227
    %265 = vmatprep.subr.bf16.mxu0 0
    %266 = vmatpush2.bf16.msra.mxu0 %v226
    %267 = vmatprep.subr.bf16.mxu0 0
    %268 = vmatpush2.bf16.msra.mxu0 %v225
    %269 = vmatprep.subr.bf16.mxu0 0
    %270 = vmatpush2.bf16.msra.mxu0 %v224
    %271 = vmatprep.subr.bf16.mxu0 0
    %272 = vmatpush2.bf16.msra.mxu0 %v223
    %273 = vmatprep.subr.bf16.mxu0 0
    %274 = vmatpush2.bf16.msra.mxu0 %v222
    %275 = vmatprep.subr.bf16.mxu0 0
    %276 = vmatpush2.bf16.msra.mxu0 %v221
    %277 = vmatprep.mubr.bf16.mxu0 %v109
    %278 = vmatmul.mubr.bf16.gmra.mxu0 %v108
    %v279 = vpop.f32.mrf.mxu0
    %v280 = vadd.f32 %v147, %v279
    %v281 = vpop.f32.mrf.mxu0
    %v282 = vpop.f32.mrf.mxu0
    %v283 = vpop.f32.mrf.mxu0
    %284 = vdwg.mxu0
    %285 = vst [vmem:[%s5] sm:$0xff] %v280
    // Predicated region
    $region26: #{_forward_jit.1} parent=1 // pred_check
      _
    $region27: #{_forward_jit.1} parent=1 // pred_check_branch
      %287 = sbr.rel (0) target = $region29
    $region28: #{_forward_jit.1} parent=1 // pred_region
      _
    $region29: #{_forward_jit.1} parent=1 // pred_fallthru
      _
    // Predicated region
    $region30: #{_forward_jit.1} parent=1 // pred_check
      _
    $region31: #{_forward_jit.1} parent=1 // pred_check_branch
      %289 = sbr.rel (0) target = $region33
    $region32: #{_forward_jit.1} parent=1 // pred_region
      _
    $region33: #{_forward_jit.1} parent=1 // pred_fallthru
      _
    %290 = vsyncpa [#allocation3], 1

</llo_original>
